<compile_context>
chip_gen: v7x
topology: tpu7x:2x2x1
jax: 0.10.0
libtpu: 0.0.40
codegen_flags: <defaults>
</compile_context>

<pallas_src>
import jax
import jax.numpy as jnp
from jax.experimental import pallas as pl
from jax.experimental.pallas import tpu as pltpu
import numpy as np

NEG_SLOPE = 0.01        # torch.nn.functional.leaky_relu default
HIDDEN = 8              # Net.hidden_layer_size
F_PAD = 8               # input-feature dim padded to 8 (extra rows/cols zero)
PAD1, PAD2 = 16, 16     # per-graph node slots inside a pair block
NODES_PER_PAIR = PAD1 + PAD2            # 32
N_BLK = 128                             # block-diag tile: 128 nodes (MXU width)
PAIRS_PER_BLK = N_BLK // NODES_PER_PAIR  # 4 graph-pairs per grid step
DATA_ROWS = N_BLK + F_PAD               # 136 = [A ; X^T]

# ---- packed parameter-slab row offsets (all sublane-8 aligned) -------------
_WG1, _BG1, _WG2, _BG2 = 0, 8, 16, 24
_WL1P, _BL1, _WL2T, _BL2, _POOL = 32, 40, 48, 56, 64
SLAB_ROWS = _POOL + 2 * PAIRS_PER_BLK   # 72


# ---------------------------------------------------------------------------
# Pallas kernel: one 128-node block (= 4 graph pairs) per grid step.
# ---------------------------------------------------------------------------
def net_kernel(d_ref, w_ref, o_ref):
    def leaky(v):
        return jnp.where(v > 0, v, NEG_SLOPE * v)

    a = d_ref[0:N_BLK, :]                                  # (128,128) block-diag A_hat
    xT = d_ref[N_BLK:DATA_ROWS, :]                         # (8,128)   features^T

    wg1 = w_ref[_WG1:_WG1 + F_PAD, 0:HIDDEN]               # (8,8) pad rows zero
    bg1 = w_ref[_BG1:_BG1 + 1, 0:HIDDEN]                   # (1,8)
    wg2 = w_ref[_WG2:_WG2 + HIDDEN, 0:HIDDEN]              # (8,8)
    bg2 = w_ref[_BG2:_BG2 + 1, 0:HIDDEN]                   # (1,8)
    wl1p = w_ref[_WL1P:_WL1P + HIDDEN, 0:HIDDEN]           # (8,8) = [wl1_top | wl1_bot]
    bl1 = w_ref[_BL1:_BL1 + 1, 0:4]                        # (1,4)
    wl2t = w_ref[_WL2T:_WL2T + 1, 0:4]                     # (1,4) = wl2^T
    bl2 = w_ref[_BL2:_BL2 + 1, 0:1]                        # (1,1)
    pool = w_ref[_POOL:_POOL + 2 * PAIRS_PER_BLK, :]       # (8,128) segment indicator

    # Both SGConv layers for all 4 pairs at once (block-diagonal A, 128-row MXU).
    ax = jnp.dot(a, xT.T, preferred_element_type=jnp.float32)                  # (128,8)
    h1 = leaky(jnp.dot(ax, wg1, preferred_element_type=jnp.float32) + bg1)     # (128,8)
    p2 = jnp.dot(a, h1, preferred_element_type=jnp.float32)                    # (128,8)
    h2 = leaky(jnp.dot(p2, wg2, preferred_element_type=jnp.float32) + bg2)     # (128,8)

    # Head layer-1 folded before pooling:  z[:,0:4]=h2@wl1_top, z[:,4:8]=h2@wl1_bot.
    z = jnp.dot(h2, wl1p, preferred_element_type=jnp.float32)                  # (128,8)
    # Per-pair / per-graph node-sum pooling as one indicator matmul.
    pz = jnp.dot(pool, z, preferred_element_type=jnp.float32)                  # (8,8)

    # h[p] = leaky( sum_g1 h2 @ wl1_top + sum_g2 h2 @ wl1_bot + bl1 )   -> (4,4)
    h = leaky(pz[0:PAIRS_PER_BLK, 0:4] + pz[PAIRS_PER_BLK:2 * PAIRS_PER_BLK, 4:8] + bl1)
    # Final l2 layer on VPU/XLU: y[p] = h[p] . wl2 + bl2                -> (4,1)
    y = jnp.sum(h * wl2t, axis=1, keepdims=True) + bl2

    # Lane-dense, fully unmasked (8,128) store; pair scalars live in rows 0:4.
    y8 = jnp.concatenate([y, jnp.zeros((8 - PAIRS_PER_BLK, 1), jnp.float32)], axis=0)
    o_ref[...] = jnp.broadcast_to(y8, (8, N_BLK))


# ---------------------------------------------------------------------------
# Glue: dense GCN normalization (PyG gcn_norm with self-loops), vmapped.
# TODO(synk): sparse scatter-based propagate is densified here (in jitted JAX
# glue) rather than done inside the kernel.
# ---------------------------------------------------------------------------
def gcn_norm_dense(edge_index, edge_weight, num_nodes):
    row, col = edge_index[0], edge_index[1]          # source, target
    loop = jnp.arange(num_nodes, dtype=edge_index.dtype)
    row = jnp.concatenate([row, loop])
    col = jnp.concatenate([col, loop])
    ew = jnp.concatenate([edge_weight, jnp.ones((num_nodes,), edge_weight.dtype)])
    deg = jnp.zeros((num_nodes,), edge_weight.dtype).at[col].add(ew)
    dinv = jnp.where(deg > 0, 1.0 / jnp.sqrt(deg), 0.0)
    norm = dinv[row] * ew * dinv[col]
    a = jnp.zeros((num_nodes, num_nodes), edge_weight.dtype)
    return a.at[col, row].add(norm)      # A_hat[dst, src]


def pack_batch(a1b, x1b, a2b, x2b):
    """Pack B graph-pairs into (B/4) [A ; X^T] slabs of shape (136,128)."""
    bsz, n1, f = x1b.shape
    n2 = x2b.shape[1]
    nb = bsz // PAIRS_PER_BLK

    a_pair = jnp.zeros((bsz, NODES_PER_PAIR, NODES_PER_PAIR), jnp.float32)
    a_pair = a_pair.at[:, 0:n1, 0:n1].set(a1b)
    a_pair = a_pair.at[:, PAD1:PAD1 + n2, PAD1:PAD1 + n2].set(a2b)
    x_pair = jnp.zeros((bsz, NODES_PER_PAIR, F_PAD), jnp.float32)
    x_pair = x_pair.at[:, 0:n1, 0:f].set(x1b)
    x_pair = x_pair.at[:, PAD1:PAD1 + n2, 0:f].set(x2b)

    a_pair = a_pair.reshape(nb, PAIRS_PER_BLK, NODES_PER_PAIR, NODES_PER_PAIR)
    x_pair = x_pair.reshape(nb, PAIRS_PER_BLK, NODES_PER_PAIR, F_PAD)

    a_big = jnp.zeros((nb, N_BLK, N_BLK), jnp.float32)
    xT_big = jnp.zeros((nb, F_PAD, N_BLK), jnp.float32)
    for p in range(PAIRS_PER_BLK):                        # static, tiny
        lo = p * NODES_PER_PAIR
        hi = lo + NODES_PER_PAIR
        a_big = a_big.at[:, lo:hi, lo:hi].set(a_pair[:, p])
        xT_big = xT_big.at[:, :, lo:hi].set(jnp.swapaxes(x_pair[:, p], 1, 2))
    return jnp.concatenate([a_big, xT_big], axis=1)       # (nb, 136, 128)


def pack_slab(params, n1, n2):
    """Shared parameter + pooling-indicator slab (72, 128)."""
    f = params["wg1"].shape[0]
    slab = jnp.zeros((SLAB_ROWS, N_BLK), jnp.float32)
    slab = slab.at[_WG1:_WG1 + f, 0:HIDDEN].set(params["wg1"])
    slab = slab.at[_BG1, 0:HIDDEN].set(params["bg1"].reshape(HIDDEN))
    slab = slab.at[_WG2:_WG2 + HIDDEN, 0:HIDDEN].set(params["wg2"])
    slab = slab.at[_BG2, 0:HIDDEN].set(params["bg2"].reshape(HIDDEN))
    wl1p = jnp.concatenate([params["wl1"][0:HIDDEN, :],
                            params["wl1"][HIDDEN:2 * HIDDEN, :]], axis=1)   # (8,8)
    slab = slab.at[_WL1P:_WL1P + HIDDEN, 0:2 * 4].set(wl1p)
    slab = slab.at[_BL1, 0:4].set(params["bl1"].reshape(4))
    slab = slab.at[_WL2T, 0:4].set(params["wl2"].reshape(4))
    slab = slab.at[_BL2, 0].set(params["bl2"].reshape(()))
    # pooling indicator: rows 0:4 sum graph-1 nodes of pairs 0..3, rows 4:8 graph-2;
    # padded node slots stay 0 so bias-only padded activations never leak in.
    for p in range(PAIRS_PER_BLK):
        lo = p * NODES_PER_PAIR
        slab = slab.at[_POOL + p, lo:lo + n1].set(1.0)
        slab = slab.at[_POOL + PAIRS_PER_BLK + p, lo + PAD1:lo + PAD1 + n2].set(1.0)
    return slab


# ---------------------------------------------------------------------------
# End-to-end forward: glue + pallas_call jitted together.
# ---------------------------------------------------------------------------
@jax.jit
def net_forward(params, x1b, ei1b, ew1b, x2b, ei2b, ew2b):
    bsz, n1, _ = x1b.shape
    n2 = x2b.shape[1]
    a1b = jax.vmap(gcn_norm_dense, in_axes=(0, 0, None))(ei1b, ew1b, n1)
    a2b = jax.vmap(gcn_norm_dense, in_axes=(0, 0, None))(ei2b, ew2b, n2)

    data = pack_batch(a1b, x1b, a2b, x2b)                 # (nb, 136, 128)
    slab = pack_slab(params, n1, n2)                      # (72, 128)
    nb = data.shape[0]

    out_tiles = pl.pallas_call(
        net_kernel,
        out_shape=jax.ShapeDtypeStruct((nb, 8, N_BLK), jnp.float32),
        grid_spec=pltpu.PrefetchScalarGridSpec(
            num_scalar_prefetch=0,
            grid=(nb,),
            in_specs=[
                pl.BlockSpec((None, DATA_ROWS, N_BLK), lambda i: (i, 0, 0)),
                pl.BlockSpec((SLAB_ROWS, N_BLK), lambda i: (0, 0)),   # resident weights
            ],
            out_specs=pl.BlockSpec((None, 8, N_BLK), lambda i: (i, 0, 0)),
        ),
        compiler_params=pltpu.CompilerParams(
            dimension_semantics=("parallel",)),
    )(data, slab)

    # pair scalars are in sublanes 0:PAIRS_PER_BLK, lane 0 of each block tile
    return out_tiles[:, 0:PAIRS_PER_BLK, 0].reshape(-1)   # (B,)


# ---------------------------------------------------------------------------
# Pure-JAX reference (unpadded, per-pair) for correctness check only.
# ---------------------------------------------------------------------------
def net_forward_ref(params, x1b, a1b, x2b, a2b):
    def leaky(v):
        return jnp.where(v > 0, v, NEG_SLOPE * v)

    def one_pair(a1, x1, a2, x2):
        def branch(a, x):
            h1 = leaky(a @ x @ params["wg1"] + params["bg1"])
            h2 = leaky(a @ h1 @ params["wg2"] + params["bg2"])
            return jnp.sum(h2, axis=0)
        feat = jnp.concatenate([branch(a1, x1), branch(a2, x2)])[None, :]
        h = leaky(feat @ params["wl1"] + params["bl1"])
        return (h @ params["wl2"] + params["bl2"]).reshape(())

    return jax.vmap(one_pair)(a1b, x1b, a2b, x2b)


if __name__ == "__main__":
    key = jax.random.PRNGKey(0)
    ks = jax.random.split(key, 16)

    B = 16                      # graph pairs (4 pairs per 128-node block -> grid=(4,))
    F_IN = 6                    # lazy in_channels of gcn1 resolved at first call
    N1, E1 = 16, 40
    N2, E2 = 10, 24
    assert B % PAIRS_PER_BLK == 0 and N1 <= PAD1 and N2 <= PAD2

    # batched graph 1
    x1b = jax.random.normal(ks[0], (B, N1, F_IN), jnp.float32)
    ei1b = jax.random.randint(ks[1], (B, 2, E1), 0, N1, jnp.int32)
    ew1b = jax.random.uniform(ks[2], (B, E1), jnp.float32, 0.5, 1.5)
    # batched graph 2
    x2b = jax.random.normal(ks[3], (B, N2, F_IN), jnp.float32)
    ei2b = jax.random.randint(ks[4], (B, 2, E2), 0, N2, jnp.int32)
    ew2b = jax.random.uniform(ks[5], (B, E2), jnp.float32, 0.5, 1.5)

    def init(k, shape, scale):
        return scale * jax.random.normal(k, shape, jnp.float32)

    params = {
        "wg1": init(ks[6], (F_IN, HIDDEN), 0.3),
        "bg1": init(ks[7], (1, HIDDEN), 0.1),
        "wg2": init(ks[8], (HIDDEN, HIDDEN), 0.3),
        "bg2": init(ks[9], (1, HIDDEN), 0.1),
        "wl1": init(ks[10], (2 * HIDDEN, 4), 0.3),
        "bl1": init(ks[11], (1, 4), 0.1),
        "wl2": init(ks[12], (4, 1), 0.3),
        "bl2": init(ks[13], (1, 1), 0.1),
    }

    out = jax.block_until_ready(
        net_forward(params, x1b, ei1b, ew1b, x2b, ei2b, ew2b))

    a1b = jax.vmap(gcn_norm_dense, in_axes=(0, 0, None))(ei1b, ew1b, N1)
    a2b = jax.vmap(gcn_norm_dense, in_axes=(0, 0, None))(ei2b, ew2b, N2)
    ref = jax.block_until_ready(net_forward_ref(params, x1b, a1b, x2b, a2b))

    np.testing.assert_allclose(np.asarray(out), np.asarray(ref),
                               rtol=1e-4, atol=1e-4)
    print("KERNEL_OK")
</pallas_src>

<mosaic_0001>
module attributes {stable_mosaic.version = 11 : i64} {
  func.func private @main(%arg0: i32) attributes {dimension_semantics = [#tpu.dimension_semantics<core_parallel>], iteration_bounds = array<i64: 2>, tpu.core_type = #tpu.core_type<sc_scalar_subcore>, window_params = []} {
    return
  }
}

module attributes {stable_mosaic.version = 11 : i64} {
  func.func private @main(%arg0: i32) attributes {dimension_semantics = [#tpu.dimension_semantics<core_parallel>], iteration_bounds = array<i64: 2>, tpu.core_type = #tpu.core_type<sc_scalar_subcore>, window_params = []} {
    return
  }
}

module attributes {stable_mosaic.version = 11 : i64} {
  func.func @net_kernel(%arg0: i32, %arg1: memref<1x136x128xf32, #tpu.memory_space<vmem>>, %arg2: memref<72x128xf32, #tpu.memory_space<vmem>>, %arg3: memref<1x8x128xf32, #tpu.memory_space<vmem>>) attributes {dimension_semantics = [#tpu.dimension_semantics<parallel>], iteration_bounds = array<i64: 4>, scalar_prefetch = 0 : i64, scratch_operands = 0 : i64, tpu.core_type = #tpu.core_type<tc>, window_params = [{transform_indices = @transform_0, window_bounds = array<i64: 1, 136, 128>}, {pipeline_mode = #tpu.pipeline_mode<synchronous>, transform_indices = @transform_1, window_bounds = array<i64: 72, 128>}, {transform_indices = @transform_2, window_bounds = array<i64: 1, 8, 128>}]} {
    %c0 = arith.constant 0 : index
    %c0_0 = arith.constant 0 : index
    %c0_1 = arith.constant 0 : index
    %0 = vector.load %arg1[%c0, %c0_0, %c0_1] : memref<1x136x128xf32, #tpu.memory_space<vmem>>, vector<1x128x128xf32>
    %1 = vector.shape_cast %0 : vector<1x128x128xf32> to vector<128x128xf32>
    %c0_2 = arith.constant 0 : index
    %c128 = arith.constant 128 : index
    %c0_3 = arith.constant 0 : index
    %2 = vector.load %arg1[%c0_2, %c128, %c0_3] : memref<1x136x128xf32, #tpu.memory_space<vmem>>, vector<1x8x128xf32>
    %3 = vector.shape_cast %2 : vector<1x8x128xf32> to vector<8x128xf32>
    %c0_4 = arith.constant 0 : index
    %c0_5 = arith.constant 0 : index
    %4 = vector.load %arg2[%c0_4, %c0_5] : memref<72x128xf32, #tpu.memory_space<vmem>>, vector<8x8xf32>
    %c8 = arith.constant 8 : index
    %c0_6 = arith.constant 0 : index
    %5 = vector.load %arg2[%c8, %c0_6] : memref<72x128xf32, #tpu.memory_space<vmem>>, vector<1x8xf32>
    %c16 = arith.constant 16 : index
    %c0_7 = arith.constant 0 : index
    %6 = vector.load %arg2[%c16, %c0_7] : memref<72x128xf32, #tpu.memory_space<vmem>>, vector<8x8xf32>
    %c24 = arith.constant 24 : index
    %c0_8 = arith.constant 0 : index
    %7 = vector.load %arg2[%c24, %c0_8] : memref<72x128xf32, #tpu.memory_space<vmem>>, vector<1x8xf32>
    %c32 = arith.constant 32 : index
    %c0_9 = arith.constant 0 : index
    %8 = vector.load %arg2[%c32, %c0_9] : memref<72x128xf32, #tpu.memory_space<vmem>>, vector<8x8xf32>
    %c40 = arith.constant 40 : index
    %c0_10 = arith.constant 0 : index
    %9 = vector.load %arg2[%c40, %c0_10] : memref<72x128xf32, #tpu.memory_space<vmem>>, vector<1x4xf32>
    %c48 = arith.constant 48 : index
    %c0_11 = arith.constant 0 : index
    %10 = vector.load %arg2[%c48, %c0_11] : memref<72x128xf32, #tpu.memory_space<vmem>>, vector<1x4xf32>
    %c56 = arith.constant 56 : index
    %c0_12 = arith.constant 0 : index
    %11 = vector.load %arg2[%c56, %c0_12] : memref<72x128xf32, #tpu.memory_space<vmem>>, vector<1x1xf32>
    %c64 = arith.constant 64 : index
    %c0_13 = arith.constant 0 : index
    %12 = vector.load %arg2[%c64, %c0_13] : memref<72x128xf32, #tpu.memory_space<vmem>>, vector<8x128xf32>
    %13 = tpu.transpose %3, [1, 0] : vector<8x128xf32> -> vector<128x8xf32>
    %cst = arith.constant dense<0.000000e+00> : vector<128x8xf32>
    %14 = tpu.matmul %1, %13, %cst {dimension_numbers = #tpu.dot_dimension_numbers<[1], [0], [0], [1], [0, 0, 1, 1], [], []>} : vector<128x128xf32>, vector<128x8xf32>, vector<128x8xf32> -> vector<128x8xf32>
    %cst_14 = arith.constant dense<0.000000e+00> : vector<128x8xf32>
    %15 = tpu.matmul %14, %4, %cst_14 {dimension_numbers = #tpu.dot_dimension_numbers<[1], [0], [0], [1], [0, 0, 1, 1], [], []>} : vector<128x8xf32>, vector<8x8xf32>, vector<128x8xf32> -> vector<128x8xf32>
    %16 = vector.broadcast %5 : vector<1x8xf32> to vector<128x8xf32>
    %17 = arith.addf %15, %16 : vector<128x8xf32>
    %cst_15 = arith.constant 0.000000e+00 : f32
    %18 = vector.broadcast %cst_15 : f32 to vector<128x8xf32>
    %19 = arith.cmpf ogt, %17, %18 : vector<128x8xf32>
    %cst_16 = arith.constant 0.00999999977 : f32
    %20 = vector.broadcast %cst_16 : f32 to vector<128x8xf32>
    %21 = arith.mulf %20, %17 : vector<128x8xf32>
    %22 = arith.select %19, %17, %21 : vector<128x8xi1>, vector<128x8xf32>
    %cst_17 = arith.constant dense<0.000000e+00> : vector<128x8xf32>
    %23 = tpu.matmul %1, %22, %cst_17 {dimension_numbers = #tpu.dot_dimension_numbers<[1], [0], [0], [1], [0, 0, 1, 1], [], []>} : vector<128x128xf32>, vector<128x8xf32>, vector<128x8xf32> -> vector<128x8xf32>
    %cst_18 = arith.constant dense<0.000000e+00> : vector<128x8xf32>
    %24 = tpu.matmul %23, %6, %cst_18 {dimension_numbers = #tpu.dot_dimension_numbers<[1], [0], [0], [1], [0, 0, 1, 1], [], []>} : vector<128x8xf32>, vector<8x8xf32>, vector<128x8xf32> -> vector<128x8xf32>
    %25 = vector.broadcast %7 : vector<1x8xf32> to vector<128x8xf32>
    %26 = arith.addf %24, %25 : vector<128x8xf32>
    %cst_19 = arith.constant 0.000000e+00 : f32
    %27 = vector.broadcast %cst_19 : f32 to vector<128x8xf32>
    %28 = arith.cmpf ogt, %26, %27 : vector<128x8xf32>
    %cst_20 = arith.constant 0.00999999977 : f32
    %29 = vector.broadcast %cst_20 : f32 to vector<128x8xf32>
    %30 = arith.mulf %29, %26 : vector<128x8xf32>
    %31 = arith.select %28, %26, %30 : vector<128x8xi1>, vector<128x8xf32>
    %cst_21 = arith.constant dense<0.000000e+00> : vector<128x8xf32>
    %32 = tpu.matmul %31, %8, %cst_21 {dimension_numbers = #tpu.dot_dimension_numbers<[1], [0], [0], [1], [0, 0, 1, 1], [], []>} : vector<128x8xf32>, vector<8x8xf32>, vector<128x8xf32> -> vector<128x8xf32>
    %cst_22 = arith.constant dense<0.000000e+00> : vector<8x8xf32>
    %33 = tpu.matmul %12, %32, %cst_22 {dimension_numbers = #tpu.dot_dimension_numbers<[1], [0], [0], [1], [0, 0, 1, 1], [], []>} : vector<8x128xf32>, vector<128x8xf32>, vector<8x8xf32> -> vector<8x8xf32>
    %34 = vector.extract_strided_slice %33 {offsets = [0, 0], sizes = [4, 4], strides = [1, 1]} : vector<8x8xf32> to vector<4x4xf32>
    %35 = vector.extract_strided_slice %33 {offsets = [4, 4], sizes = [4, 4], strides = [1, 1]} : vector<8x8xf32> to vector<4x4xf32>
    %36 = arith.addf %34, %35 : vector<4x4xf32>
    %37 = vector.broadcast %9 : vector<1x4xf32> to vector<4x4xf32>
    %38 = arith.addf %36, %37 : vector<4x4xf32>
    %cst_23 = arith.constant 0.000000e+00 : f32
    %39 = vector.broadcast %cst_23 : f32 to vector<4x4xf32>
    %40 = arith.cmpf ogt, %38, %39 : vector<4x4xf32>
    %cst_24 = arith.constant 0.00999999977 : f32
    %41 = vector.broadcast %cst_24 : f32 to vector<4x4xf32>
    %42 = arith.mulf %41, %38 : vector<4x4xf32>
    %43 = arith.select %40, %38, %42 : vector<4x4xi1>, vector<4x4xf32>
    %44 = vector.broadcast %10 : vector<1x4xf32> to vector<4x4xf32>
    %45 = arith.mulf %43, %44 : vector<4x4xf32>
    %cst_25 = arith.constant dense<0.000000e+00> : vector<4xf32>
    %46 = vector.multi_reduction <add>, %45, %cst_25 [1] : vector<4x4xf32> to vector<4xf32>
    %47 = vector.shape_cast %46 : vector<4xf32> to vector<4x1xf32>
    %48 = vector.broadcast %11 : vector<1x1xf32> to vector<4x1xf32>
    %49 = arith.addf %47, %48 : vector<4x1xf32>
    %cst_26 = arith.constant 0.000000e+00 : f32
    %50 = vector.broadcast %cst_26 : f32 to vector<4x1xf32>
    %51 = tpu.concatenate %49, %50 in 0 : vector<4x1xf32>, vector<4x1xf32> -> vector<8x1xf32>
    %52 = vector.shape_cast %51 : vector<8x1xf32> to vector<8x1xf32>
    %53 = vector.broadcast %52 : vector<8x1xf32> to vector<8x128xf32>
    %c0_27 = arith.constant 0 : index
    %c0_28 = arith.constant 0 : index
    %c0_29 = arith.constant 0 : index
    %54 = vector.load %arg3[%c0_27, %c0_28, %c0_29] : memref<1x8x128xf32, #tpu.memory_space<vmem>>, vector<1x8x128xf32>
    %55 = vector.shape_cast %54 : vector<1x8x128xf32> to vector<8x128xf32>
    %56 = vector.shape_cast %53 : vector<8x128xf32> to vector<1x8x128xf32>
    tpu.vector_store %arg3[%c0_27, %c0_28, %c0_29], %56 {strides = array<i32>} : memref<1x8x128xf32, #tpu.memory_space<vmem>>, vector<1x8x128xf32>,
    return
  }
  func.func @transform_0(%arg0: i32) -> (i32, i32, i32) {
    %c0_i32 = arith.constant 0 : i32
    %c0_i32_0 = arith.constant 0 : i32
    %c0_i32_1 = arith.constant 0 : i32
    return %arg0, %c0_i32, %c0_i32_0 : i32, i32, i32
  }
  func.func @transform_1(%arg0: i32) -> (i32, i32) {
    %c0_i32 = arith.constant 0 : i32
    %c0_i32_0 = arith.constant 0 : i32
    %c0_i32_1 = arith.constant 0 : i32
    return %c0_i32, %c0_i32_0 : i32, i32
  }
  func.func @transform_2(%arg0: i32) -> (i32, i32, i32) {
    %c0_i32 = arith.constant 0 : i32
    %c0_i32_0 = arith.constant 0 : i32
    %c0_i32_1 = arith.constant 0 : i32
    return %arg0, %c0_i32, %c0_i32_0 : i32, i32, i32
  }
}

</mosaic_0001>

<llo_original>
// kernel: squeeze.25
$region0: #{squeeze.25}
  %s0 = inlined_call_operand.vmem [shape: f32[4,4], index: 0, kind: input, shape index: {}]
  %s1 = inlined_call_operand.hbm [shape: f32[16], index: 1, kind: output, shape index: {}]
  $region1: #{squeeze.25} parent=0
    #allocation0 [shape = 'u8[512]{0}', space=vmem, size = 0x400, scoped, tag = 'operand span for operand 1']
    #allocation1 [shape = 's32[1]{0}', space=sflag, size = 0x4, scoped, tag = 'scoped memory for squeeze.25']
    #allocation2 [shape = 'u8[4096]{0}', space=vmem, size = 0x1000, scoped, tag = 'scoped mem for output reshape']
    #allocation3 [shape = 'u8[4096]{0}', space=vmem, size = 0x1000, scoped, tag = 'scoped mem for input reshape']
    %2 = vsyncpa [#allocation1], 0
    %s4 = sshllo.u32 0, 4
    %v5 = vld [vmem:[%s0] sm:%s4]
    %6 = vst [vmem:[#allocation3] sm:%s4] %v5
    %v7 = vld [vmem:[#allocation3] sm:$0x1]
    %vm8 = vcmask 31744
    %9 = vst.msk [vmem:[#allocation2] sm:$0x1] %vm8, %v7
    %s10 = scalar_lea.vmem [#allocation3], 3
    %v11 = vld [vmem:[%s10] sm:$0x1]
    %12 = vrot.lane.b32.xlu0 %v11, 12
    %v13 = vpop.permute.xlu0 %12
    %vm14 = vcmask 130144
    %15 = vst.msk [vmem:[#allocation2] sm:$0x1] %vm14, %v13
    %s16 = scalar_lea.vmem [#allocation3], 2
    %v17 = vld [vmem:[%s16] sm:$0x1]
    %18 = vrot.lane.b32.xlu0 %v17, 8
    %v19 = vpop.permute.xlu0 %18
    %vm20 = vcmask 97344
    %21 = vst.msk [vmem:[#allocation2] sm:$0x1] %vm20, %v19
    %s22 = scalar_lea.vmem [#allocation3], 1
    %v23 = vld [vmem:[%s22] sm:$0x1]
    %24 = vrot.lane.b32.xlu0 %v23, 4
    %v25 = vpop.permute.xlu0 %24
    %vm26 = vcmask 64544
    %27 = vst.msk [vmem:[#allocation2] sm:$0x1] %vm26, %v25
    %s29 = sshllo.u32 0, 1
    %v31 = vld [vmem:[#allocation2] sm:%s29]
    %s32 = sshllo.u32 0, 1
    %33 = vst [vmem:[#allocation0] sm:%s32] %v31
    %s35 = ssub.s32 16, 16
    %36 = vsyncadd [#allocation1], %s35
    %s38 = sshll.u32 [#allocation0], 4
    %s39 = int_to_ptr.vmem [resolvable:$true] %s38
    %41 = dma.vmem_to_hbm [thread:$0]  %s39, 16, %s1, [#allocation1]
    %42 = dma.done [#allocation1], 16
    %43 = vsyncpa [#allocation1], 1

// kernel: net_forward.1
$region0: #{net_forward.1}
  #allocation0 [shape = 'u32[]', space=smem, size = 0x4, offset = 0x4, fixed_abs, tag = 'smem constant byte address 0x4 - core index']
  #allocation1 [shape = 'u32[144,128]{1,0:T(1,128)}', space=vmem, size = 0x12000, scoped, tag = 'internal scratch']
  %s0 = inlined_call_operand.vmem [shape: f32[4,136,128], index: 0, kind: input, shape index: {}]
  %s1 = inlined_call_operand.vmem [shape: f32[72,128], index: 1, kind: input, shape index: {}]
  %s2 = inlined_call_operand.vmem [shape: f32[4,8,128], index: 2, kind: output, shape index: {}]
  %s3 = sld [smem:[#allocation0]]
  $region41: #{net_forward.1} parent=0
    _
  %s5 = ssub.s32 1, %s3
  %s6 = scalar_select 0, %s5, %s3
  loop: start=0, step=1, limit=6
  $region2: #{net_forward.1} parent=0 // loop_pre_header
    _
  $region3: #{net_forward.1} parent=0 // loop_header
    %s8 = sphi 0, %s12
    %p9 = scmp.ge.s32.totalorder %s8, 6
    %s18 = sphi 0, %s20
    %s21 = sphi 0, %s18
    %s22 = sphi 0, %s21
    %s38 = sphi 0, %s22
    %s42 = sphi 0, %s42
    %s44 = sphi 0, %s42
    %s45 = sphi 0, %s44
    %s59 = sphi 0, %s45
    %s65 = sphi 0, %s67
    %s68 = sphi 0, %s65
    %s69 = sphi 0, %s68
    %s85 = sphi 0, %s69
  $region4: #{net_forward.1} parent=0 // loop_header_branch
    %11 = sbr.rel (%p9) target = $region8
  $region5: #{net_forward.1} parent=0 // loop_body
    %s13 = ssub.s32 %s8, 1
    %s14 = ssub.s32 %s8, 2
    %s15 = sadd.s32 %s8, 1
    %s16 = ssub.s32 %s8, %s15
    %p17 = scmp.eq.s32.totalorder %s16, 0
    %s19 = sadd.s32 %s18, 1
    %s20 = scalar_select %p17, %s18, %s19
    %p23 = pneg %p17
    %p24 = scmp.eq.s32.totalorder %s8, 3
    %p25 = por %p23, %p24
    %p26 = scmp.ne.s32.totalorder %s18, %s21
    %p27 = scmp.eq.s32.totalorder %s8, 0
    %p28 = por %p26, %p27
    %p29 = scmp.ne.s32.totalorder %s18, %s21
    %p30 = scmp.eq.s32.totalorder %s13, 3
    %p31 = por %p29, %p30
    %p32 = scmp.ne.s32.totalorder %s21, %s22
    %p33 = scmp.eq.s32.totalorder %s13, 0
    %p34 = por %p32, %p33
    %p35 = scmp.ne.s32.totalorder %s21, %s22
    %p36 = scmp.eq.s32.totalorder %s14, 3
    %p37 = por %p35, %p36
    %p39 = scmp.ne.s32.totalorder %s22, %s38
    %p40 = scmp.eq.s32.totalorder %s14, 0
    %p41 = por %p39, %p40
    %s43 = sadd.s32 %s42, 1
    %p46 = scmp.eq.s32.totalorder %s8, 3
    %p47 = scmp.ne.s32.totalorder %s42, %s44
    %p48 = scmp.eq.s32.totalorder %s8, 0
    %p49 = por %p47, %p48
    %p50 = scmp.ne.s32.totalorder %s42, %s44
    %p51 = scmp.eq.s32.totalorder %s13, 3
    %p52 = por %p50, %p51
    %p53 = scmp.ne.s32.totalorder %s44, %s45
    %p54 = scmp.eq.s32.totalorder %s13, 0
    %p55 = por %p53, %p54
    %p56 = scmp.ne.s32.totalorder %s44, %s45
    %p57 = scmp.eq.s32.totalorder %s14, 3
    %p58 = por %p56, %p57
    %p60 = scmp.ne.s32.totalorder %s45, %s59
    %p61 = scmp.eq.s32.totalorder %s14, 0
    %p62 = por %p60, %p61
    %s63 = ssub.s32 %s8, %s15
    %p64 = scmp.eq.s32.totalorder %s63, 0
    %s66 = sadd.s32 %s65, 1
    %s67 = scalar_select %p64, %s65, %s66
    %p70 = pneg %p64
    %p71 = scmp.eq.s32.totalorder %s8, 3
    %p72 = por %p70, %p71
    %p73 = scmp.ne.s32.totalorder %s65, %s68
    %p74 = scmp.eq.s32.totalorder %s8, 0
    %p75 = por %p73, %p74
    %p76 = scmp.ne.s32.totalorder %s65, %s68
    %p77 = scmp.eq.s32.totalorder %s13, 3
    %p78 = por %p76, %p77
    %p79 = scmp.ne.s32.totalorder %s68, %s69
    %p80 = scmp.eq.s32.totalorder %s13, 0
    %p81 = por %p79, %p80
    %p82 = scmp.ne.s32.totalorder %s68, %s69
    %p83 = scmp.eq.s32.totalorder %s14, 3
    %p84 = por %p82, %p83
    %p86 = scmp.ne.s32.totalorder %s69, %s85
    %p87 = scmp.eq.s32.totalorder %s14, 0
    %p88 = por %p86, %p87
    %p89 = scmp.le.s32.totalorder 1, %s8
    %p90 = scmp.lt.s32.totalorder %s8, 5
    %p91 = pnand %p89, %p90
    %p92 = pneg %p91
    // Predicated region
    $region9: #{net_forward.1} parent=5 // pred_check
      _
    $region10: #{net_forward.1} parent=5 // pred_check_branch
      %94 = sbr.rel (%p91) target = $region12
    $region11: #{net_forward.1} parent=5 // pred_region
      %s95 = ssub.s32 %s8, 1
      // Predicated region
      $region13: #{net_forward.1} parent=11 // pred_check
        %p96 = pneg %p55
      $region14: #{net_forward.1} parent=11 // pred_check_branch
        %98 = sbr.rel (%p96) target = $region16
      $region15: #{net_forward.1} parent=11 // pred_region
        _
      $region16: #{net_forward.1} parent=11 // pred_fallthru
        _
    $region12: #{net_forward.1} parent=5 // pred_fallthru
      _
    %p99 = scmp.lt.s32.totalorder %s8, 4
    // Predicated region
    $region17: #{net_forward.1} parent=5 // pred_check
      %p100 = pneg %p99
    $region18: #{net_forward.1} parent=5 // pred_check_branch
      %102 = sbr.rel (%p100) target = $region20
    $region19: #{net_forward.1} parent=5 // pred_region
      // Predicated region
      $region21: #{net_forward.1} parent=19 // pred_check
        %p103 = pneg %p28
      $region22: #{net_forward.1} parent=19 // pred_check_branch
        %105 = sbr.rel (%p103) target = $region24
      $region23: #{net_forward.1} parent=19 // pred_region
        %p106 = scmp.lt.s32.totalorder %s8, 3
        %s107 = scalar_select %p106, %s8, 3
        %s108 = smul.addr %s107, 17
        %s109 = smul.addr %s108, 8
        %s110 = scalar_lea.vmem %s0, %s109
      $region24: #{net_forward.1} parent=19 // pred_fallthru
        _
    $region20: #{net_forward.1} parent=5 // pred_fallthru
      _
    %p111 = scmp.le.s32.totalorder 1, %s8
    %p112 = scmp.lt.s32.totalorder %s8, 5
    %p113 = pnand %p111, %p112
    %p114 = pneg %p113
    // Predicated region
    $region25: #{net_forward.1} parent=5 // pred_check
      _
    $region26: #{net_forward.1} parent=5 // pred_check_branch
      %116 = sbr.rel (%p113) target = $region28
    $region27: #{net_forward.1} parent=5 // pred_region
      %s117 = ssub.s32 %s8, 1
      %p118 = scmp.lt.s32.totalorder %s13, 3
      %s119 = scalar_select %p118, %s13, 3
      %s120 = smul.addr %s119, 17
      %s121 = smul.addr %s120, 8
      %s122 = scalar_lea.vmem %s0, %s121
      %p123 = pneg %p34
      %p124 = pneg %p31
      %p125 = pneg %p55
      %p126 = pneg %p52
      %p127 = pneg %p81
      %p128 = pneg %p78
      %p129 = scmp.lt.s32.totalorder %s13, 3
      %s130 = scalar_select %p129, %s13, 3
      %s131 = smul.addr %s130, 8
      %s132 = scalar_lea.vmem %s2, %s131
      %p133 = scmp.lt.s32.totalorder %s13, 3
      %s134 = scalar_select %p133, %s13, 3
      %s135 = smul.addr %s134, 17
      %s136 = smul.addr %s135, 8
      %s137 = scalar_lea.vmem %s0, %s136
      %p138 = scmp.lt.s32.totalorder %s13, 3
      %s139 = scalar_select %p138, %s13, 3
      %s140 = smul.addr %s139, 8
      %s141 = scalar_lea.vmem %s2, %s140
      %v142 = vld [vmem:[%s137] sm:$0xff]
      %v143 = vld [vmem:[%s137 + $0x8] sm:$0xff]
      %v144 = vld [vmem:[%s137 + $0x10] sm:$0xff]
      %v145 = vld [vmem:[%s137 + $0x18] sm:$0xff]
      %v146 = vld [vmem:[%s137 + $0x20] sm:$0xff]
      %v147 = vld [vmem:[%s137 + $0x28] sm:$0xff]
      %v148 = vld [vmem:[%s137 + $0x30] sm:$0xff]
      %v149 = vld [vmem:[%s137 + $0x38] sm:$0xff]
      %v150 = vld [vmem:[%s137 + $0x40] sm:$0xff]
      %v151 = vld [vmem:[%s137 + $0x48] sm:$0xff]
      %v152 = vld [vmem:[%s137 + $0x50] sm:$0xff]
      %v153 = vld [vmem:[%s137 + $0x58] sm:$0xff]
      %v154 = vld [vmem:[%s137 + $0x60] sm:$0xff]
      %v155 = vld [vmem:[%s137 + $0x68] sm:$0xff]
      %v156 = vld [vmem:[%s137 + $0x70] sm:$0xff]
      %v157 = vld [vmem:[%s137 + $0x78] sm:$0xff]
      %v158 = vld [vmem:[%s137 + $0x80] sm:$0xff]
      %v159 = vld [vmem:[%s1] sm:$0xff]
      %v160 = vld [vmem:[%s1 + $0x8] sm:$0x1]
      %v161 = vld [vmem:[%s1 + $0x10] sm:$0xff]
      %v162 = vld [vmem:[%s1 + $0x18] sm:$0x1]
      %v163 = vld [vmem:[%s1 + $0x20] sm:$0xff]
      %v164 = vld [vmem:[%s1 + $0x28] sm:$0x1]
      %v165 = vld [vmem:[%s1 + $0x30] sm:$0x1]
      %v166 = vld [vmem:[%s1 + $0x38] sm:$0x1]
      %v167 = vld [vmem:[%s1 + $0x40] sm:$0xff]
      %168 = vmatprep.subr.mxu0 0.0
      %169 = vmatpush1.xpose.msra.mxu0 %v158
      %170 = vmatprep.subr.mxu0 0.0
      %171 = vmatpush1.xpose.msra.mxu0 0.0
      %172 = vmatprep.subr.mxu0 0.0
      %173 = vmatpush1.xpose.msra.mxu0 0.0
      %174 = vmatprep.subr.mxu0 0.0
      %175 = vmatpush1.xpose.msra.mxu0 0.0
      %176 = vmatprep.subr.mxu0 0.0
      %177 = vmatpush1.xpose.msra.mxu0 0.0
      %178 = vmatprep.subr.mxu0 0.0
      %179 = vmatpush1.xpose.msra.mxu0 0.0
      %180 = vmatprep.subr.mxu0 0.0
      %181 = vmatpush1.xpose.msra.mxu0 0.0
      %182 = vmatprep.subr.mxu0 0.0
      %183 = vmatpush1.xpose.msra.mxu0 0.0
      %184 = vmatprep.subr.mxu0 0.0
      %185 = vmatpush1.xpose.msra.mxu0 0.0
      %186 = vmatprep.subr.mxu0 0.0
      %187 = vmatpush1.xpose.msra.mxu0 0.0
      %188 = vmatprep.subr.mxu0 0.0
      %189 = vmatpush1.xpose.msra.mxu0 0.0
      %190 = vmatprep.subr.mxu0 0.0
      %191 = vmatpush1.xpose.msra.mxu0 0.0
      %192 = vmatprep.subr.mxu0 0.0
      %193 = vmatpush1.xpose.msra.mxu0 0.0
      %194 = vmatprep.subr.mxu0 0.0
      %195 = vmatpush1.xpose.msra.mxu0 0.0
      %196 = vmatprep.subr.mxu0 0.0
      %197 = vmatpush1.xpose.msra.mxu0 0.0
      %198 = vmatprep.subr.mxu0 0.0
      %199 = vmatpush1.xpose.msra.mxu0 0.0
      %200 = vmatprep.subr.mxu0 0.0
      %201 = vmatpush1.xpose.msra.mxu0 0.0
      %202 = vmatprep.subr.mxu0 0.0
      %203 = vmatpush1.xpose.msra.mxu0 0.0
      %204 = vmatprep.subr.mxu0 0.0
      %205 = vmatpush1.xpose.msra.mxu0 0.0
      %206 = vmatprep.subr.mxu0 0.0
      %207 = vmatpush1.xpose.msra.mxu0 0.0
      %208 = vmatprep.subr.mxu0 0.0
      %209 = vmatpush1.xpose.msra.mxu0 0.0
      %210 = vmatprep.subr.mxu0 0.0
      %211 = vmatpush1.xpose.msra.mxu0 0.0
      %212 = vmatprep.subr.mxu0 0.0
      %213 = vmatpush1.xpose.msra.mxu0 0.0
      %214 = vmatprep.subr.mxu0 0.0
      %215 = vmatpush1.xpose.msra.mxu0 0.0
      %216 = vmatprep.subr.mxu0 0.0
      %217 = vmatpush1.xpose.msra.mxu0 0.0
      %218 = vmatprep.subr.mxu0 0.0
      %219 = vmatpush1.xpose.msra.mxu0 0.0
      %220 = vmatprep.subr.mxu0 0.0
      %221 = vmatpush1.xpose.msra.mxu0 0.0
      %222 = vmatprep.subr.mxu0 0.0
      %223 = vmatpush1.xpose.msra.mxu0 0.0
      %224 = vmatprep.subr.mxu0 0.0
      %225 = vmatpush1.xpose.msra.mxu0 0.0
      %226 = vmatprep.subr.mxu0 0.0
      %227 = vmatpush1.xpose.msra.mxu0 0.0
      %228 = vmatprep.subr.mxu0 0.0
      %229 = vmatpush1.xpose.msra.mxu0 0.0
      %230 = vmatprep.subr.mxu0 0.0
      %231 = vmatpush1.xpose.msra.mxu0 0.0
      %232 = vmatprep.mubr.f32.mxu0 0.0
      %233 = vmatmul.mubr.f32.gmra.mrb[0].mxu0 %v142
      %v234 = vpop.f32.mrb[0].mxu0
      %v235 = vadd.f32 0.0, %v234
      %v236 = vpop.f32.mrb[0].mxu0
      %237 = vmatprep.mubr.f32.mxu0 0.0
      %238 = vmatmul.mubr.f32.gmra.mrb[0].mxu0 %v143
      %v239 = vpop.f32.mrb[0].mxu0
      %v240 = vadd.f32 0.0, %v239
      %v241 = vpop.f32.mrb[0].mxu0
      %242 = vmatprep.mubr.f32.mxu0 0.0
      %243 = vmatmul.mubr.f32.gmra.mrb[0].mxu0 %v144
      %v244 = vpop.f32.mrb[0].mxu0
      %v245 = vadd.f32 0.0, %v244
      %v246 = vpop.f32.mrb[0].mxu0
      %247 = vmatprep.mubr.f32.mxu0 0.0
      %248 = vmatmul.mubr.f32.gmra.mrb[0].mxu0 %v145
      %v249 = vpop.f32.mrb[0].mxu0
      %v250 = vadd.f32 0.0, %v249
      %v251 = vpop.f32.mrb[0].mxu0
      %252 = vmatprep.mubr.f32.mxu0 0.0
      %253 = vmatmul.mubr.f32.gmra.mrb[0].mxu0 %v146
      %v254 = vpop.f32.mrb[0].mxu0
      %v255 = vadd.f32 0.0, %v254
      %v256 = vpop.f32.mrb[0].mxu0
      %257 = vmatprep.mubr.f32.mxu0 0.0
      %258 = vmatmul.mubr.f32.gmra.mrb[0].mxu0 %v147
      %v259 = vpop.f32.mrb[0].mxu0
      %v260 = vadd.f32 0.0, %v259
      %v261 = vpop.f32.mrb[0].mxu0
      %262 = vmatprep.mubr.f32.mxu0 0.0
      %263 = vmatmul.mubr.f32.gmra.mrb[0].mxu0 %v148
      %v264 = vpop.f32.mrb[0].mxu0
      %v265 = vadd.f32 0.0, %v264
      %v266 = vpop.f32.mrb[0].mxu0
      %267 = vmatprep.mubr.f32.mxu0 0.0
      %268 = vmatmul.mubr.f32.gmra.mrb[0].mxu0 %v149
      %v269 = vpop.f32.mrb[0].mxu0
      %v270 = vadd.f32 0.0, %v269
      %v271 = vpop.f32.mrb[0].mxu0
      %272 = vmatprep.mubr.f32.mxu0 0.0
      %273 = vmatmul.mubr.f32.gmra.mrb[0].mxu0 %v150
      %v274 = vpop.f32.mrb[0].mxu0
      %v275 = vadd.f32 0.0, %v274
      %v276 = vpop.f32.mrb[0].mxu0
      %277 = vmatprep.mubr.f32.mxu0 0.0
      %278 = vmatmul.mubr.f32.gmra.mrb[0].mxu0 %v151
      %v279 = vpop.f32.mrb[0].mxu0
      %v280 = vadd.f32 0.0, %v279
      %v281 = vpop.f32.mrb[0].mxu0
      %282 = vmatprep.mubr.f32.mxu0 0.0
      %283 = vmatmul.mubr.f32.gmra.mrb[0].mxu0 %v152
      %v284 = vpop.f32.mrb[0].mxu0
      %v285 = vadd.f32 0.0, %v284
      %v286 = vpop.f32.mrb[0].mxu0
      %287 = vmatprep.mubr.f32.mxu0 0.0
      %288 = vmatmul.mubr.f32.gmra.mrb[0].mxu0 %v153
      %v289 = vpop.f32.mrb[0].mxu0
      %v290 = vadd.f32 0.0, %v289
      %v291 = vpop.f32.mrb[0].mxu0
      %292 = vmatprep.mubr.f32.mxu0 0.0
      %293 = vmatmul.mubr.f32.gmra.mrb[0].mxu0 %v154
      %v294 = vpop.f32.mrb[0].mxu0
      %v295 = vadd.f32 0.0, %v294
      %v296 = vpop.f32.mrb[0].mxu0
      %297 = vmatprep.mubr.f32.mxu0 0.0
      %298 = vmatmul.mubr.f32.gmra.mrb[0].mxu0 %v155
      %v299 = vpop.f32.mrb[0].mxu0
      %v300 = vadd.f32 0.0, %v299
      %v301 = vpop.f32.mrb[0].mxu0
      %302 = vmatprep.mubr.f32.mxu0 0.0
      %303 = vmatmul.mubr.f32.gmra.mrb[0].mxu0 %v156
      %v304 = vpop.f32.mrb[0].mxu0
      %v305 = vadd.f32 0.0, %v304
      %v306 = vpop.f32.mrb[0].mxu0
      %307 = vmatprep.mubr.f32.mxu0 0.0
      %308 = vmatmul.mubr.f32.gmra.mrb[0].mxu0 %v157
      %v309 = vpop.f32.mrb[0].mxu0
      %v310 = vadd.f32 0.0, %v309
      %v311 = vpop.f32.mrb[0].mxu0
      %312 = vdwg.mxu0
      %v313 = vlaneseq
      %v314 = vshrl.u32 %v313, 7
      %v315 = vsub.s32 0, %v314
      %v316 = vrot.slane %v160, %v315
      %vm317 = vcmask 64512
      %v319 = vsel %vm317, %v235, 0
      %v322 = vsel %vm317, %v240, 0
      %v325 = vsel %vm317, %v245, 0
      %v328 = vsel %vm317, %v250, 0
      %v331 = vsel %vm317, %v255, 0
      %v334 = vsel %vm317, %v260, 0
      %v337 = vsel %vm317, %v265, 0
      %v340 = vsel %vm317, %v270, 0
      %v343 = vsel %vm317, %v275, 0
      %v346 = vsel %vm317, %v280, 0
      %v349 = vsel %vm317, %v285, 0
      %v352 = vsel %vm317, %v290, 0
      %v355 = vsel %vm317, %v295, 0
      %v358 = vsel %vm317, %v300, 0
      %v361 = vsel %vm317, %v305, 0
      %v364 = vsel %vm317, %v310, 0
      %366 = vmatprep.subr.mxu0 0.0
      %367 = vmatpush1.msra.mxu0 %v159
      %368 = vmatprep.subr.mxu0 0.0
      %369 = vmatpush1.msra.mxu0 0.0
      %370 = vmatprep.subr.mxu0 0.0
      %371 = vmatpush1.msra.mxu0 0.0
      %372 = vmatprep.subr.mxu0 0.0
      %373 = vmatpush1.msra.mxu0 0.0
      %374 = vmatprep.subr.mxu0 0.0
      %375 = vmatpush1.msra.mxu0 0.0
      %376 = vmatprep.subr.mxu0 0.0
      %377 = vmatpush1.msra.mxu0 0.0
      %378 = vmatprep.subr.mxu0 0.0
      %379 = vmatpush1.msra.mxu0 0.0
      %380 = vmatprep.subr.mxu0 0.0
      %381 = vmatpush1.msra.mxu0 0.0
      %382 = vmatprep.subr.mxu0 0.0
      %383 = vmatpush1.msra.mxu0 0.0
      %384 = vmatprep.subr.mxu0 0.0
      %385 = vmatpush1.msra.mxu0 0.0
      %386 = vmatprep.subr.mxu0 0.0
      %387 = vmatpush1.msra.mxu0 0.0
      %388 = vmatprep.subr.mxu0 0.0
      %389 = vmatpush1.msra.mxu0 0.0
      %390 = vmatprep.subr.mxu0 0.0
      %391 = vmatpush1.msra.mxu0 0.0
      %392 = vmatprep.subr.mxu0 0.0
      %393 = vmatpush1.msra.mxu0 0.0
      %394 = vmatprep.subr.mxu0 0.0
      %395 = vmatpush1.msra.mxu0 0.0
      %396 = vmatprep.subr.mxu0 0.0
      %397 = vmatpush1.msra.mxu0 0.0
      %398 = vmatprep.subr.mxu0 0.0
      %399 = vmatpush1.msra.mxu0 0.0
      %400 = vmatprep.subr.mxu0 0.0
      %401 = vmatpush1.msra.mxu0 0.0
      %402 = vmatprep.subr.mxu0 0.0
      %403 = vmatpush1.msra.mxu0 0.0
      %404 = vmatprep.subr.mxu0 0.0
      %405 = vmatpush1.msra.mxu0 0.0
      %406 = vmatprep.subr.mxu0 0.0
      %407 = vmatpush1.msra.mxu0 0.0
      %408 = vmatprep.subr.mxu0 0.0
      %409 = vmatpush1.msra.mxu0 0.0
      %410 = vmatprep.subr.mxu0 0.0
      %411 = vmatpush1.msra.mxu0 0.0
      %412 = vmatprep.subr.mxu0 0.0
      %413 = vmatpush1.msra.mxu0 0.0
      %414 = vmatprep.subr.mxu0 0.0
      %415 = vmatpush1.msra.mxu0 0.0
      %416 = vmatprep.subr.mxu0 0.0
      %417 = vmatpush1.msra.mxu0 0.0
      %418 = vmatprep.subr.mxu0 0.0
      %419 = vmatpush1.msra.mxu0 0.0
      %420 = vmatprep.subr.mxu0 0.0
      %421 = vmatpush1.msra.mxu0 0.0
      %422 = vmatprep.subr.mxu0 0.0
      %423 = vmatpush1.msra.mxu0 0.0
      %424 = vmatprep.subr.mxu0 0.0
      %425 = vmatpush1.msra.mxu0 0.0
      %426 = vmatprep.subr.mxu0 0.0
      %427 = vmatpush1.msra.mxu0 0.0
      %428 = vmatprep.subr.mxu0 0.0
      %429 = vmatpush1.msra.mxu0 0.0
      %430 = vmatprep.mubr.f32.mxu0 0.0
      %431 = vmatmul.mubr.f32.gmra.mrb[0].mxu0 %v319
      %v432 = vpop.f32.mrb[0].mxu0
      %v433 = vadd.f32 %v316, %v432
      %v434 = vpop.f32.mrb[0].mxu0
      %435 = vmatprep.mubr.f32.mxu0 0.0
      %436 = vmatmul.mubr.f32.gmra.mrb[0].mxu0 %v322
      %v437 = vpop.f32.mrb[0].mxu0
      %v438 = vadd.f32 %v316, %v437
      %v439 = vpop.f32.mrb[0].mxu0
      %440 = vmatprep.mubr.f32.mxu0 0.0
      %441 = vmatmul.mubr.f32.gmra.mrb[0].mxu0 %v325
      %v442 = vpop.f32.mrb[0].mxu0
      %v443 = vadd.f32 %v316, %v442
      %v444 = vpop.f32.mrb[0].mxu0
      %445 = vmatprep.mubr.f32.mxu0 0.0
      %446 = vmatmul.mubr.f32.gmra.mrb[0].mxu0 %v328
      %v447 = vpop.f32.mrb[0].mxu0
      %v448 = vadd.f32 %v316, %v447
      %v449 = vpop.f32.mrb[0].mxu0
      %450 = vmatprep.mubr.f32.mxu0 0.0
      %451 = vmatmul.mubr.f32.gmra.mrb[0].mxu0 %v331
      %v452 = vpop.f32.mrb[0].mxu0
      %v453 = vadd.f32 %v316, %v452
      %v454 = vpop.f32.mrb[0].mxu0
      %455 = vmatprep.mubr.f32.mxu0 0.0
      %456 = vmatmul.mubr.f32.gmra.mrb[0].mxu0 %v334
      %v457 = vpop.f32.mrb[0].mxu0
      %v458 = vadd.f32 %v316, %v457
      %v459 = vpop.f32.mrb[0].mxu0
      %460 = vmatprep.mubr.f32.mxu0 0.0
      %461 = vmatmul.mubr.f32.gmra.mrb[0].mxu0 %v337
      %v462 = vpop.f32.mrb[0].mxu0
      %v463 = vadd.f32 %v316, %v462
      %v464 = vpop.f32.mrb[0].mxu0
      %465 = vmatprep.mubr.f32.mxu0 0.0
      %466 = vmatmul.mubr.f32.gmra.mrb[0].mxu0 %v340
      %v467 = vpop.f32.mrb[0].mxu0
      %v468 = vadd.f32 %v316, %v467
      %v469 = vpop.f32.mrb[0].mxu0
      %470 = vmatprep.mubr.f32.mxu0 0.0
      %471 = vmatmul.mubr.f32.gmra.mrb[0].mxu0 %v343
      %v472 = vpop.f32.mrb[0].mxu0
      %v473 = vadd.f32 %v316, %v472
      %v474 = vpop.f32.mrb[0].mxu0
      %475 = vmatprep.mubr.f32.mxu0 0.0
      %476 = vmatmul.mubr.f32.gmra.mrb[0].mxu0 %v346
      %v477 = vpop.f32.mrb[0].mxu0
      %v478 = vadd.f32 %v316, %v477
      %v479 = vpop.f32.mrb[0].mxu0
      %480 = vmatprep.mubr.f32.mxu0 0.0
      %481 = vmatmul.mubr.f32.gmra.mrb[0].mxu0 %v349
      %v482 = vpop.f32.mrb[0].mxu0
      %v483 = vadd.f32 %v316, %v482
      %v484 = vpop.f32.mrb[0].mxu0
      %485 = vmatprep.mubr.f32.mxu0 0.0
      %486 = vmatmul.mubr.f32.gmra.mrb[0].mxu0 %v352
      %v487 = vpop.f32.mrb[0].mxu0
      %v488 = vadd.f32 %v316, %v487
      %v489 = vpop.f32.mrb[0].mxu0
      %490 = vmatprep.mubr.f32.mxu0 0.0
      %491 = vmatmul.mubr.f32.gmra.mrb[0].mxu0 %v355
      %v492 = vpop.f32.mrb[0].mxu0
      %v493 = vadd.f32 %v316, %v492
      %v494 = vpop.f32.mrb[0].mxu0
      %495 = vmatprep.mubr.f32.mxu0 0.0
      %496 = vmatmul.mubr.f32.gmra.mrb[0].mxu0 %v358
      %v497 = vpop.f32.mrb[0].mxu0
      %v498 = vadd.f32 %v316, %v497
      %v499 = vpop.f32.mrb[0].mxu0
      %500 = vmatprep.mubr.f32.mxu0 0.0
      %501 = vmatmul.mubr.f32.gmra.mrb[0].mxu0 %v361
      %v502 = vpop.f32.mrb[0].mxu0
      %v503 = vadd.f32 %v316, %v502
      %v504 = vpop.f32.mrb[0].mxu0
      %505 = vmatprep.mubr.f32.mxu0 0.0
      %506 = vmatmul.mubr.f32.gmra.mrb[0].mxu0 %v364
      %v507 = vpop.f32.mrb[0].mxu0
      %v508 = vadd.f32 %v316, %v507
      %v509 = vpop.f32.mrb[0].mxu0
      %510 = vdwg.mxu0
      %vm511 = vcmp.gt.f32.partialorder %v433, 0.0
      %vm512 = vcmp.gt.f32.partialorder %v438, 0.0
      %vm513 = vcmp.gt.f32.partialorder %v443, 0.0
      %vm514 = vcmp.gt.f32.partialorder %v448, 0.0
      %vm515 = vcmp.gt.f32.partialorder %v453, 0.0
      %vm516 = vcmp.gt.f32.partialorder %v458, 0.0
      %vm517 = vcmp.gt.f32.partialorder %v463, 0.0
      %vm518 = vcmp.gt.f32.partialorder %v468, 0.0
      %vm519 = vcmp.gt.f32.partialorder %v473, 0.0
      %vm520 = vcmp.gt.f32.partialorder %v478, 0.0
      %vm521 = vcmp.gt.f32.partialorder %v483, 0.0
      %vm522 = vcmp.gt.f32.partialorder %v488, 0.0
      %vm523 = vcmp.gt.f32.partialorder %v493, 0.0
      %vm524 = vcmp.gt.f32.partialorder %v498, 0.0
      %vm525 = vcmp.gt.f32.partialorder %v503, 0.0
      %vm526 = vcmp.gt.f32.partialorder %v508, 0.0
      %v527 = vmul.f32 %v433, 0.01
      %v528 = vmul.f32 %v438, 0.01
      %v529 = vmul.f32 %v443, 0.01
      %v530 = vmul.f32 %v448, 0.01
      %v531 = vmul.f32 %v453, 0.01
      %v532 = vmul.f32 %v458, 0.01
      %v533 = vmul.f32 %v463, 0.01
      %v534 = vmul.f32 %v468, 0.01
      %v535 = vmul.f32 %v473, 0.01
      %v536 = vmul.f32 %v478, 0.01
      %v537 = vmul.f32 %v483, 0.01
      %v538 = vmul.f32 %v488, 0.01
      %v539 = vmul.f32 %v493, 0.01
      %v540 = vmul.f32 %v498, 0.01
      %v541 = vmul.f32 %v503, 0.01
      %v542 = vmul.f32 %v508, 0.01
      %v543 = vsel %vm511, %v433, %v527
      %v544 = vsel %vm512, %v438, %v528
      %v545 = vsel %vm513, %v443, %v529
      %v546 = vsel %vm514, %v448, %v530
      %v547 = vsel %vm515, %v453, %v531
      %v548 = vsel %vm516, %v458, %v532
      %v549 = vsel %vm517, %v463, %v533
      %v550 = vsel %vm518, %v468, %v534
      %v551 = vsel %vm519, %v473, %v535
      %v552 = vsel %vm520, %v478, %v536
      %v553 = vsel %vm521, %v483, %v537
      %v554 = vsel %vm522, %v488, %v538
      %v555 = vsel %vm523, %v493, %v539
      %v556 = vsel %vm524, %v498, %v540
      %v557 = vsel %vm525, %v503, %v541
      %v558 = vsel %vm526, %v508, %v542
      %559 = vmatprep.subr.mxu0 0.0
      %560 = vmatpush1.msra.mxu0 %v543
      %561 = vmatprep.subr.mxu0 0.0
      %562 = vmatpush1.msra.mxu0 %v544
      %563 = vmatprep.subr.mxu0 0.0
      %564 = vmatpush1.msra.mxu0 %v545
      %565 = vmatprep.subr.mxu0 0.0
      %566 = vmatpush1.msra.mxu0 %v546
      %567 = vmatprep.subr.mxu0 0.0
      %568 = vmatpush1.msra.mxu0 %v547
      %569 = vmatprep.subr.mxu0 0.0
      %570 = vmatpush1.msra.mxu0 %v548
      %571 = vmatprep.subr.mxu0 0.0
      %572 = vmatpush1.msra.mxu0 %v549
      %573 = vmatprep.subr.mxu0 0.0
      %574 = vmatpush1.msra.mxu0 %v550
      %575 = vmatprep.subr.mxu0 0.0
      %576 = vmatpush1.msra.mxu0 %v551
      %577 = vmatprep.subr.mxu0 0.0
      %578 = vmatpush1.msra.mxu0 %v552
      %579 = vmatprep.subr.mxu0 0.0
      %580 = vmatpush1.msra.mxu0 %v553
      %581 = vmatprep.subr.mxu0 0.0
      %582 = vmatpush1.msra.mxu0 %v554
      %583 = vmatprep.subr.mxu0 0.0
      %584 = vmatpush1.msra.mxu0 %v555
      %585 = vmatprep.subr.mxu0 0.0
      %586 = vmatpush1.msra.mxu0 %v556
      %587 = vmatprep.subr.mxu0 0.0
      %588 = vmatpush1.msra.mxu0 %v557
      %589 = vmatprep.subr.mxu0 0.0
      %590 = vmatpush1.msra.mxu0 %v558
      %591 = vmatprep.subr.mxu0 0.0
      %592 = vmatpush1.msra.mxu0 0.0
      %593 = vmatprep.subr.mxu0 0.0
      %594 = vmatpush1.msra.mxu0 0.0
      %595 = vmatprep.subr.mxu0 0.0
      %596 = vmatpush1.msra.mxu0 0.0
      %597 = vmatprep.subr.mxu0 0.0
      %598 = vmatpush1.msra.mxu0 0.0
      %599 = vmatprep.subr.mxu0 0.0
      %600 = vmatpush1.msra.mxu0 0.0
      %601 = vmatprep.subr.mxu0 0.0
      %602 = vmatpush1.msra.mxu0 0.0
      %603 = vmatprep.subr.mxu0 0.0
      %604 = vmatpush1.msra.mxu0 0.0
      %605 = vmatprep.subr.mxu0 0.0
      %606 = vmatpush1.msra.mxu0 0.0
      %607 = vmatprep.subr.mxu0 0.0
      %608 = vmatpush1.msra.mxu0 0.0
      %609 = vmatprep.subr.mxu0 0.0
      %610 = vmatpush1.msra.mxu0 0.0
      %611 = vmatprep.subr.mxu0 0.0
      %612 = vmatpush1.msra.mxu0 0.0
      %613 = vmatprep.subr.mxu0 0.0
      %614 = vmatpush1.msra.mxu0 0.0
      %615 = vmatprep.subr.mxu0 0.0
      %616 = vmatpush1.msra.mxu0 0.0
      %617 = vmatprep.subr.mxu0 0.0
      %618 = vmatpush1.msra.mxu0 0.0
      %619 = vmatprep.subr.mxu0 0.0
      %620 = vmatpush1.msra.mxu0 0.0
      %621 = vmatprep.subr.mxu0 0.0
      %622 = vmatpush1.msra.mxu0 0.0
      %623 = vmatprep.mubr.f32.mxu0 0.0
      %624 = vmatmul.mubr.f32.gmra.mrb[0].mxu0 %v142
      %v625 = vpop.f32.mrb[0].mxu0
      %v626 = vadd.f32 0.0, %v625
      %v627 = vpop.f32.mrb[0].mxu0
      %628 = vmatprep.mubr.f32.mxu0 0.0
      %629 = vmatmul.mubr.f32.gmra.mrb[0].mxu0 %v143
      %v630 = vpop.f32.mrb[0].mxu0
      %v631 = vadd.f32 0.0, %v630
      %v632 = vpop.f32.mrb[0].mxu0
      %633 = vmatprep.mubr.f32.mxu0 0.0
      %634 = vmatmul.mubr.f32.gmra.mrb[0].mxu0 %v144
      %v635 = vpop.f32.mrb[0].mxu0
      %v636 = vadd.f32 0.0, %v635
      %v637 = vpop.f32.mrb[0].mxu0
      %638 = vmatprep.mubr.f32.mxu0 0.0
      %639 = vmatmul.mubr.f32.gmra.mrb[0].mxu0 %v145
      %v640 = vpop.f32.mrb[0].mxu0
      %v641 = vadd.f32 0.0, %v640
      %v642 = vpop.f32.mrb[0].mxu0
      %643 = vmatprep.mubr.f32.mxu0 0.0
      %644 = vmatmul.mubr.f32.gmra.mrb[0].mxu0 %v146
      %v645 = vpop.f32.mrb[0].mxu0
      %v646 = vadd.f32 0.0, %v645
      %v647 = vpop.f32.mrb[0].mxu0
      %648 = vmatprep.mubr.f32.mxu0 0.0
      %649 = vmatmul.mubr.f32.gmra.mrb[0].mxu0 %v147
      %v650 = vpop.f32.mrb[0].mxu0
      %v651 = vadd.f32 0.0, %v650
      %v652 = vpop.f32.mrb[0].mxu0
      %653 = vmatprep.mubr.f32.mxu0 0.0
      %654 = vmatmul.mubr.f32.gmra.mrb[0].mxu0 %v148
      %v655 = vpop.f32.mrb[0].mxu0
      %v656 = vadd.f32 0.0, %v655
      %v657 = vpop.f32.mrb[0].mxu0
      %658 = vmatprep.mubr.f32.mxu0 0.0
      %659 = vmatmul.mubr.f32.gmra.mrb[0].mxu0 %v149
      %v660 = vpop.f32.mrb[0].mxu0
      %v661 = vadd.f32 0.0, %v660
      %v662 = vpop.f32.mrb[0].mxu0
      %663 = vmatprep.mubr.f32.mxu0 0.0
      %664 = vmatmul.mubr.f32.gmra.mrb[0].mxu0 %v150
      %v665 = vpop.f32.mrb[0].mxu0
      %v666 = vadd.f32 0.0, %v665
      %v667 = vpop.f32.mrb[0].mxu0
      %668 = vmatprep.mubr.f32.mxu0 0.0
      %669 = vmatmul.mubr.f32.gmra.mrb[0].mxu0 %v151
      %v670 = vpop.f32.mrb[0].mxu0
      %v671 = vadd.f32 0.0, %v670
      %v672 = vpop.f32.mrb[0].mxu0
      %673 = vmatprep.mubr.f32.mxu0 0.0
      %674 = vmatmul.mubr.f32.gmra.mrb[0].mxu0 %v152
      %v675 = vpop.f32.mrb[0].mxu0
      %v676 = vadd.f32 0.0, %v675
      %v677 = vpop.f32.mrb[0].mxu0
      %678 = vmatprep.mubr.f32.mxu0 0.0
      %679 = vmatmul.mubr.f32.gmra.mrb[0].mxu0 %v153
      %v680 = vpop.f32.mrb[0].mxu0
      %v681 = vadd.f32 0.0, %v680
      %v682 = vpop.f32.mrb[0].mxu0
      %683 = vmatprep.mubr.f32.mxu0 0.0
      %684 = vmatmul.mubr.f32.gmra.mrb[0].mxu0 %v154
      %v685 = vpop.f32.mrb[0].mxu0
      %v686 = vadd.f32 0.0, %v685
      %v687 = vpop.f32.mrb[0].mxu0
      %688 = vmatprep.mubr.f32.mxu0 0.0
      %689 = vmatmul.mubr.f32.gmra.mrb[0].mxu0 %v155
      %v690 = vpop.f32.mrb[0].mxu0
      %v691 = vadd.f32 0.0, %v690
      %v692 = vpop.f32.mrb[0].mxu0
      %693 = vmatprep.mubr.f32.mxu0 0.0
      %694 = vmatmul.mubr.f32.gmra.mrb[0].mxu0 %v156
      %v695 = vpop.f32.mrb[0].mxu0
      %v696 = vadd.f32 0.0, %v695
      %v697 = vpop.f32.mrb[0].mxu0
      %698 = vmatprep.mubr.f32.mxu0 0.0
      %699 = vmatmul.mubr.f32.gmra.mrb[0].mxu0 %v157
      %v700 = vpop.f32.mrb[0].mxu0
      %v701 = vadd.f32 0.0, %v700
      %v702 = vpop.f32.mrb[0].mxu0
      %703 = vdwg.mxu0
      %v704 = vlaneseq
      %v705 = vshrl.u32 %v704, 7
      %v706 = vsub.s32 0, %v705
      %v707 = vrot.slane %v162, %v706
      %v709 = vsel %vm317, %v626, 0
      %v712 = vsel %vm317, %v631, 0
      %v715 = vsel %vm317, %v636, 0
      %v718 = vsel %vm317, %v641, 0
      %v721 = vsel %vm317, %v646, 0
      %v724 = vsel %vm317, %v651, 0
      %v727 = vsel %vm317, %v656, 0
      %v730 = vsel %vm317, %v661, 0
      %v733 = vsel %vm317, %v666, 0
      %v736 = vsel %vm317, %v671, 0
      %v739 = vsel %vm317, %v676, 0
      %v742 = vsel %vm317, %v681, 0
      %v745 = vsel %vm317, %v686, 0
      %v748 = vsel %vm317, %v691, 0
      %v751 = vsel %vm317, %v696, 0
      %v754 = vsel %vm317, %v701, 0
      %756 = vmatprep.subr.mxu0 0.0
      %757 = vmatpush1.msra.mxu0 %v161
      %758 = vmatprep.subr.mxu0 0.0
      %759 = vmatpush1.msra.mxu0 0.0
      %760 = vmatprep.subr.mxu0 0.0
      %761 = vmatpush1.msra.mxu0 0.0
      %762 = vmatprep.subr.mxu0 0.0
      %763 = vmatpush1.msra.mxu0 0.0
      %764 = vmatprep.subr.mxu0 0.0
      %765 = vmatpush1.msra.mxu0 0.0
      %766 = vmatprep.subr.mxu0 0.0
      %767 = vmatpush1.msra.mxu0 0.0
      %768 = vmatprep.subr.mxu0 0.0
      %769 = vmatpush1.msra.mxu0 0.0
      %770 = vmatprep.subr.mxu0 0.0
      %771 = vmatpush1.msra.mxu0 0.0
      %772 = vmatprep.subr.mxu0 0.0
      %773 = vmatpush1.msra.mxu0 0.0
      %774 = vmatprep.subr.mxu0 0.0
      %775 = vmatpush1.msra.mxu0 0.0
      %776 = vmatprep.subr.mxu0 0.0
      %777 = vmatpush1.msra.mxu0 0.0
      %778 = vmatprep.subr.mxu0 0.0
      %779 = vmatpush1.msra.mxu0 0.0
      %780 = vmatprep.subr.mxu0 0.0
      %781 = vmatpush1.msra.mxu0 0.0
      %782 = vmatprep.subr.mxu0 0.0
      %783 = vmatpush1.msra.mxu0 0.0
      %784 = vmatprep.subr.mxu0 0.0
      %785 = vmatpush1.msra.mxu0 0.0
      %786 = vmatprep.subr.mxu0 0.0
      %787 = vmatpush1.msra.mxu0 0.0
      %788 = vmatprep.subr.mxu0 0.0
      %789 = vmatpush1.msra.mxu0 0.0
      %790 = vmatprep.subr.mxu0 0.0
      %791 = vmatpush1.msra.mxu0 0.0
      %792 = vmatprep.subr.mxu0 0.0
      %793 = vmatpush1.msra.mxu0 0.0
      %794 = vmatprep.subr.mxu0 0.0
      %795 = vmatpush1.msra.mxu0 0.0
      %796 = vmatprep.subr.mxu0 0.0
      %797 = vmatpush1.msra.mxu0 0.0
      %798 = vmatprep.subr.mxu0 0.0
      %799 = vmatpush1.msra.mxu0 0.0
      %800 = vmatprep.subr.mxu0 0.0
      %801 = vmatpush1.msra.mxu0 0.0
      %802 = vmatprep.subr.mxu0 0.0
      %803 = vmatpush1.msra.mxu0 0.0
      %804 = vmatprep.subr.mxu0 0.0
      %805 = vmatpush1.msra.mxu0 0.0
      %806 = vmatprep.subr.mxu0 0.0
      %807 = vmatpush1.msra.mxu0 0.0
      %808 = vmatprep.subr.mxu0 0.0
      %809 = vmatpush1.msra.mxu0 0.0
      %810 = vmatprep.subr.mxu0 0.0
      %811 = vmatpush1.msra.mxu0 0.0
      %812 = vmatprep.subr.mxu0 0.0
      %813 = vmatpush1.msra.mxu0 0.0
      %814 = vmatprep.subr.mxu0 0.0
      %815 = vmatpush1.msra.mxu0 0.0
      %816 = vmatprep.subr.mxu0 0.0
      %817 = vmatpush1.msra.mxu0 0.0
      %818 = vmatprep.subr.mxu0 0.0
      %819 = vmatpush1.msra.mxu0 0.0
      %820 = vmatprep.mubr.f32.mxu0 0.0
      %821 = vmatmul.mubr.f32.gmra.mrb[0].mxu0 %v709
      %v822 = vpop.f32.mrb[0].mxu0
      %v823 = vadd.f32 %v707, %v822
      %v824 = vpop.f32.mrb[0].mxu0
      %825 = vmatprep.mubr.f32.mxu0 0.0
      %826 = vmatmul.mubr.f32.gmra.mrb[0].mxu0 %v712
      %v827 = vpop.f32.mrb[0].mxu0
      %v828 = vadd.f32 %v707, %v827
      %v829 = vpop.f32.mrb[0].mxu0
      %830 = vmatprep.mubr.f32.mxu0 0.0
      %831 = vmatmul.mubr.f32.gmra.mrb[0].mxu0 %v715
      %v832 = vpop.f32.mrb[0].mxu0
      %v833 = vadd.f32 %v707, %v832
      %v834 = vpop.f32.mrb[0].mxu0
      %835 = vmatprep.mubr.f32.mxu0 0.0
      %836 = vmatmul.mubr.f32.gmra.mrb[0].mxu0 %v718
      %v837 = vpop.f32.mrb[0].mxu0
      %v838 = vadd.f32 %v707, %v837
      %v839 = vpop.f32.mrb[0].mxu0
      %840 = vmatprep.mubr.f32.mxu0 0.0
      %841 = vmatmul.mubr.f32.gmra.mrb[0].mxu0 %v721
      %v842 = vpop.f32.mrb[0].mxu0
      %v843 = vadd.f32 %v707, %v842
      %v844 = vpop.f32.mrb[0].mxu0
      %845 = vmatprep.mubr.f32.mxu0 0.0
      %846 = vmatmul.mubr.f32.gmra.mrb[0].mxu0 %v724
      %v847 = vpop.f32.mrb[0].mxu0
      %v848 = vadd.f32 %v707, %v847
      %v849 = vpop.f32.mrb[0].mxu0
      %850 = vmatprep.mubr.f32.mxu0 0.0
      %851 = vmatmul.mubr.f32.gmra.mrb[0].mxu0 %v727
      %v852 = vpop.f32.mrb[0].mxu0
      %v853 = vadd.f32 %v707, %v852
      %v854 = vpop.f32.mrb[0].mxu0
      %855 = vmatprep.mubr.f32.mxu0 0.0
      %856 = vmatmul.mubr.f32.gmra.mrb[0].mxu0 %v730
      %v857 = vpop.f32.mrb[0].mxu0
      %v858 = vadd.f32 %v707, %v857
      %v859 = vpop.f32.mrb[0].mxu0
      %860 = vmatprep.mubr.f32.mxu0 0.0
      %861 = vmatmul.mubr.f32.gmra.mrb[0].mxu0 %v733
      %v862 = vpop.f32.mrb[0].mxu0
      %v863 = vadd.f32 %v707, %v862
      %v864 = vpop.f32.mrb[0].mxu0
      %865 = vmatprep.mubr.f32.mxu0 0.0
      %866 = vmatmul.mubr.f32.gmra.mrb[0].mxu0 %v736
      %v867 = vpop.f32.mrb[0].mxu0
      %v868 = vadd.f32 %v707, %v867
      %v869 = vpop.f32.mrb[0].mxu0
      %870 = vmatprep.mubr.f32.mxu0 0.0
      %871 = vmatmul.mubr.f32.gmra.mrb[0].mxu0 %v739
      %v872 = vpop.f32.mrb[0].mxu0
      %v873 = vadd.f32 %v707, %v872
      %v874 = vpop.f32.mrb[0].mxu0
      %875 = vmatprep.mubr.f32.mxu0 0.0
      %876 = vmatmul.mubr.f32.gmra.mrb[0].mxu0 %v742
      %v877 = vpop.f32.mrb[0].mxu0
      %v878 = vadd.f32 %v707, %v877
      %v879 = vpop.f32.mrb[0].mxu0
      %880 = vmatprep.mubr.f32.mxu0 0.0
      %881 = vmatmul.mubr.f32.gmra.mrb[0].mxu0 %v745
      %v882 = vpop.f32.mrb[0].mxu0
      %v883 = vadd.f32 %v707, %v882
      %v884 = vpop.f32.mrb[0].mxu0
      %885 = vmatprep.mubr.f32.mxu0 0.0
      %886 = vmatmul.mubr.f32.gmra.mrb[0].mxu0 %v748
      %v887 = vpop.f32.mrb[0].mxu0
      %v888 = vadd.f32 %v707, %v887
      %v889 = vpop.f32.mrb[0].mxu0
      %890 = vmatprep.mubr.f32.mxu0 0.0
      %891 = vmatmul.mubr.f32.gmra.mrb[0].mxu0 %v751
      %v892 = vpop.f32.mrb[0].mxu0
      %v893 = vadd.f32 %v707, %v892
      %v894 = vpop.f32.mrb[0].mxu0
      %895 = vmatprep.mubr.f32.mxu0 0.0
      %896 = vmatmul.mubr.f32.gmra.mrb[0].mxu0 %v754
      %v897 = vpop.f32.mrb[0].mxu0
      %v898 = vadd.f32 %v707, %v897
      %v899 = vpop.f32.mrb[0].mxu0
      %900 = vdwg.mxu0
      %vm901 = vcmp.gt.f32.partialorder %v823, 0.0
      %vm902 = vcmp.gt.f32.partialorder %v828, 0.0
      %vm903 = vcmp.gt.f32.partialorder %v833, 0.0
      %vm904 = vcmp.gt.f32.partialorder %v838, 0.0
      %vm905 = vcmp.gt.f32.partialorder %v843, 0.0
      %vm906 = vcmp.gt.f32.partialorder %v848, 0.0
      %vm907 = vcmp.gt.f32.partialorder %v853, 0.0
      %vm908 = vcmp.gt.f32.partialorder %v858, 0.0
      %vm909 = vcmp.gt.f32.partialorder %v863, 0.0
      %vm910 = vcmp.gt.f32.partialorder %v868, 0.0
      %vm911 = vcmp.gt.f32.partialorder %v873, 0.0
      %vm912 = vcmp.gt.f32.partialorder %v878, 0.0
      %vm913 = vcmp.gt.f32.partialorder %v883, 0.0
      %vm914 = vcmp.gt.f32.partialorder %v888, 0.0
      %vm915 = vcmp.gt.f32.partialorder %v893, 0.0
      %vm916 = vcmp.gt.f32.partialorder %v898, 0.0
      %v917 = vmul.f32 %v823, 0.01
      %v918 = vmul.f32 %v828, 0.01
      %v919 = vmul.f32 %v833, 0.01
      %v920 = vmul.f32 %v838, 0.01
      %v921 = vmul.f32 %v843, 0.01
      %v922 = vmul.f32 %v848, 0.01
      %v923 = vmul.f32 %v853, 0.01
      %v924 = vmul.f32 %v858, 0.01
      %v925 = vmul.f32 %v863, 0.01
      %v926 = vmul.f32 %v868, 0.01
      %v927 = vmul.f32 %v873, 0.01
      %v928 = vmul.f32 %v878, 0.01
      %v929 = vmul.f32 %v883, 0.01
      %v930 = vmul.f32 %v888, 0.01
      %v931 = vmul.f32 %v893, 0.01
      %v932 = vmul.f32 %v898, 0.01
      %v933 = vsel %vm901, %v823, %v917
      %v934 = vsel %vm902, %v828, %v918
      %v935 = vsel %vm903, %v833, %v919
      %v936 = vsel %vm904, %v838, %v920
      %v937 = vsel %vm905, %v843, %v921
      %v938 = vsel %vm906, %v848, %v922
      %v939 = vsel %vm907, %v853, %v923
      %v940 = vsel %vm908, %v858, %v924
      %v941 = vsel %vm909, %v863, %v925
      %v942 = vsel %vm910, %v868, %v926
      %v943 = vsel %vm911, %v873, %v927
      %v944 = vsel %vm912, %v878, %v928
      %v945 = vsel %vm913, %v883, %v929
      %v946 = vsel %vm914, %v888, %v930
      %v947 = vsel %vm915, %v893, %v931
      %v948 = vsel %vm916, %v898, %v932
      %v950 = vsel %vm317, %v933, 0
      %v953 = vsel %vm317, %v934, 0
      %v956 = vsel %vm317, %v935, 0
      %v959 = vsel %vm317, %v936, 0
      %v962 = vsel %vm317, %v937, 0
      %v965 = vsel %vm317, %v938, 0
      %v968 = vsel %vm317, %v939, 0
      %v971 = vsel %vm317, %v940, 0
      %v974 = vsel %vm317, %v941, 0
      %v977 = vsel %vm317, %v942, 0
      %v980 = vsel %vm317, %v943, 0
      %v983 = vsel %vm317, %v944, 0
      %v986 = vsel %vm317, %v945, 0
      %v989 = vsel %vm317, %v946, 0
      %v992 = vsel %vm317, %v947, 0
      %v995 = vsel %vm317, %v948, 0
      %997 = vmatprep.subr.mxu0 0.0
      %998 = vmatpush1.msra.mxu0 %v163
      %999 = vmatprep.subr.mxu0 0.0
      %1000 = vmatpush1.msra.mxu0 0.0
      %1001 = vmatprep.subr.mxu0 0.0
      %1002 = vmatpush1.msra.mxu0 0.0
      %1003 = vmatprep.subr.mxu0 0.0
      %1004 = vmatpush1.msra.mxu0 0.0
      %1005 = vmatprep.subr.mxu0 0.0
      %1006 = vmatpush1.msra.mxu0 0.0
      %1007 = vmatprep.subr.mxu0 0.0
      %1008 = vmatpush1.msra.mxu0 0.0
      %1009 = vmatprep.subr.mxu0 0.0
      %1010 = vmatpush1.msra.mxu0 0.0
      %1011 = vmatprep.subr.mxu0 0.0
      %1012 = vmatpush1.msra.mxu0 0.0
      %1013 = vmatprep.subr.mxu0 0.0
      %1014 = vmatpush1.msra.mxu0 0.0
      %1015 = vmatprep.subr.mxu0 0.0
      %1016 = vmatpush1.msra.mxu0 0.0
      %1017 = vmatprep.subr.mxu0 0.0
      %1018 = vmatpush1.msra.mxu0 0.0
      %1019 = vmatprep.subr.mxu0 0.0
      %1020 = vmatpush1.msra.mxu0 0.0
      %1021 = vmatprep.subr.mxu0 0.0
      %1022 = vmatpush1.msra.mxu0 0.0
      %1023 = vmatprep.subr.mxu0 0.0
      %1024 = vmatpush1.msra.mxu0 0.0
      %1025 = vmatprep.subr.mxu0 0.0
      %1026 = vmatpush1.msra.mxu0 0.0
      %1027 = vmatprep.subr.mxu0 0.0
      %1028 = vmatpush1.msra.mxu0 0.0
      %1029 = vmatprep.subr.mxu0 0.0
      %1030 = vmatpush1.msra.mxu0 0.0
      %1031 = vmatprep.subr.mxu0 0.0
      %1032 = vmatpush1.msra.mxu0 0.0
      %1033 = vmatprep.subr.mxu0 0.0
      %1034 = vmatpush1.msra.mxu0 0.0
      %1035 = vmatprep.subr.mxu0 0.0
      %1036 = vmatpush1.msra.mxu0 0.0
      %1037 = vmatprep.subr.mxu0 0.0
      %1038 = vmatpush1.msra.mxu0 0.0
      %1039 = vmatprep.subr.mxu0 0.0
      %1040 = vmatpush1.msra.mxu0 0.0
      %1041 = vmatprep.subr.mxu0 0.0
      %1042 = vmatpush1.msra.mxu0 0.0
      %1043 = vmatprep.subr.mxu0 0.0
      %1044 = vmatpush1.msra.mxu0 0.0
      %1045 = vmatprep.subr.mxu0 0.0
      %1046 = vmatpush1.msra.mxu0 0.0
      %1047 = vmatprep.subr.mxu0 0.0
      %1048 = vmatpush1.msra.mxu0 0.0
      %1049 = vmatprep.subr.mxu0 0.0
      %1050 = vmatpush1.msra.mxu0 0.0
      %1051 = vmatprep.subr.mxu0 0.0
      %1052 = vmatpush1.msra.mxu0 0.0
      %1053 = vmatprep.subr.mxu0 0.0
      %1054 = vmatpush1.msra.mxu0 0.0
      %1055 = vmatprep.subr.mxu0 0.0
      %1056 = vmatpush1.msra.mxu0 0.0
      %1057 = vmatprep.subr.mxu0 0.0
      %1058 = vmatpush1.msra.mxu0 0.0
      %1059 = vmatprep.subr.mxu0 0.0
      %1060 = vmatpush1.msra.mxu0 0.0
      %1061 = vmatprep.mubr.f32.mxu0 0.0
      %1062 = vmatmul.mubr.f32.gmra.mrb[0].mxu0 %v950
      %v1063 = vpop.f32.mrb[0].mxu0
      %v1064 = vadd.f32 0.0, %v1063
      %v1065 = vpop.f32.mrb[0].mxu0
      %1066 = vmatprep.mubr.f32.mxu0 0.0
      %1067 = vmatmul.mubr.f32.gmra.mrb[0].mxu0 %v953
      %v1068 = vpop.f32.mrb[0].mxu0
      %v1069 = vadd.f32 0.0, %v1068
      %v1070 = vpop.f32.mrb[0].mxu0
      %1071 = vmatprep.mubr.f32.mxu0 0.0
      %1072 = vmatmul.mubr.f32.gmra.mrb[0].mxu0 %v956
      %v1073 = vpop.f32.mrb[0].mxu0
      %v1074 = vadd.f32 0.0, %v1073
      %v1075 = vpop.f32.mrb[0].mxu0
      %1076 = vmatprep.mubr.f32.mxu0 0.0
      %1077 = vmatmul.mubr.f32.gmra.mrb[0].mxu0 %v959
      %v1078 = vpop.f32.mrb[0].mxu0
      %v1079 = vadd.f32 0.0, %v1078
      %v1080 = vpop.f32.mrb[0].mxu0
      %1081 = vmatprep.mubr.f32.mxu0 0.0
      %1082 = vmatmul.mubr.f32.gmra.mrb[0].mxu0 %v962
      %v1083 = vpop.f32.mrb[0].mxu0
      %v1084 = vadd.f32 0.0, %v1083
      %v1085 = vpop.f32.mrb[0].mxu0
      %1086 = vmatprep.mubr.f32.mxu0 0.0
      %1087 = vmatmul.mubr.f32.gmra.mrb[0].mxu0 %v965
      %v1088 = vpop.f32.mrb[0].mxu0
      %v1089 = vadd.f32 0.0, %v1088
      %v1090 = vpop.f32.mrb[0].mxu0
      %1091 = vmatprep.mubr.f32.mxu0 0.0
      %1092 = vmatmul.mubr.f32.gmra.mrb[0].mxu0 %v968
      %v1093 = vpop.f32.mrb[0].mxu0
      %v1094 = vadd.f32 0.0, %v1093
      %v1095 = vpop.f32.mrb[0].mxu0
      %1096 = vmatprep.mubr.f32.mxu0 0.0
      %1097 = vmatmul.mubr.f32.gmra.mrb[0].mxu0 %v971
      %v1098 = vpop.f32.mrb[0].mxu0
      %v1099 = vadd.f32 0.0, %v1098
      %v1100 = vpop.f32.mrb[0].mxu0
      %1101 = vmatprep.mubr.f32.mxu0 0.0
      %1102 = vmatmul.mubr.f32.gmra.mrb[0].mxu0 %v974
      %v1103 = vpop.f32.mrb[0].mxu0
      %v1104 = vadd.f32 0.0, %v1103
      %v1105 = vpop.f32.mrb[0].mxu0
      %1106 = vmatprep.mubr.f32.mxu0 0.0
      %1107 = vmatmul.mubr.f32.gmra.mrb[0].mxu0 %v977
      %v1108 = vpop.f32.mrb[0].mxu0
      %v1109 = vadd.f32 0.0, %v1108
      %v1110 = vpop.f32.mrb[0].mxu0
      %1111 = vmatprep.mubr.f32.mxu0 0.0
      %1112 = vmatmul.mubr.f32.gmra.mrb[0].mxu0 %v980
      %v1113 = vpop.f32.mrb[0].mxu0
      %v1114 = vadd.f32 0.0, %v1113
      %v1115 = vpop.f32.mrb[0].mxu0
      %1116 = vmatprep.mubr.f32.mxu0 0.0
      %1117 = vmatmul.mubr.f32.gmra.mrb[0].mxu0 %v983
      %v1118 = vpop.f32.mrb[0].mxu0
      %v1119 = vadd.f32 0.0, %v1118
      %v1120 = vpop.f32.mrb[0].mxu0
      %1121 = vmatprep.mubr.f32.mxu0 0.0
      %1122 = vmatmul.mubr.f32.gmra.mrb[0].mxu0 %v986
      %v1123 = vpop.f32.mrb[0].mxu0
      %v1124 = vadd.f32 0.0, %v1123
      %v1125 = vpop.f32.mrb[0].mxu0
      %1126 = vmatprep.mubr.f32.mxu0 0.0
      %1127 = vmatmul.mubr.f32.gmra.mrb[0].mxu0 %v989
      %v1128 = vpop.f32.mrb[0].mxu0
      %v1129 = vadd.f32 0.0, %v1128
      %v1130 = vpop.f32.mrb[0].mxu0
      %1131 = vmatprep.mubr.f32.mxu0 0.0
      %1132 = vmatmul.mubr.f32.gmra.mrb[0].mxu0 %v992
      %v1133 = vpop.f32.mrb[0].mxu0
      %v1134 = vadd.f32 0.0, %v1133
      %v1135 = vpop.f32.mrb[0].mxu0
      %1136 = vmatprep.mubr.f32.mxu0 0.0
      %1137 = vmatmul.mubr.f32.gmra.mrb[0].mxu0 %v995
      %v1138 = vpop.f32.mrb[0].mxu0
      %v1139 = vadd.f32 0.0, %v1138
      %v1140 = vpop.f32.mrb[0].mxu0
      %1141 = vdwg.mxu0
      %1142 = vmatprep.subr.mxu0 0.0
      %1143 = vmatpush1.msra.mxu0 %v1064
      %1144 = vmatprep.subr.mxu0 0.0
      %1145 = vmatpush1.msra.mxu0 %v1069
      %1146 = vmatprep.subr.mxu0 0.0
      %1147 = vmatpush1.msra.mxu0 %v1074
      %1148 = vmatprep.subr.mxu0 0.0
      %1149 = vmatpush1.msra.mxu0 %v1079
      %1150 = vmatprep.subr.mxu0 0.0
      %1151 = vmatpush1.msra.mxu0 %v1084
      %1152 = vmatprep.subr.mxu0 0.0
      %1153 = vmatpush1.msra.mxu0 %v1089
      %1154 = vmatprep.subr.mxu0 0.0
      %1155 = vmatpush1.msra.mxu0 %v1094
      %1156 = vmatprep.subr.mxu0 0.0
      %1157 = vmatpush1.msra.mxu0 %v1099
      %1158 = vmatprep.subr.mxu0 0.0
      %1159 = vmatpush1.msra.mxu0 %v1104
      %1160 = vmatprep.subr.mxu0 0.0
      %1161 = vmatpush1.msra.mxu0 %v1109
      %1162 = vmatprep.subr.mxu0 0.0
      %1163 = vmatpush1.msra.mxu0 %v1114
      %1164 = vmatprep.subr.mxu0 0.0
      %1165 = vmatpush1.msra.mxu0 %v1119
      %1166 = vmatprep.subr.mxu0 0.0
      %1167 = vmatpush1.msra.mxu0 %v1124
      %1168 = vmatprep.subr.mxu0 0.0
      %1169 = vmatpush1.msra.mxu0 %v1129
      %1170 = vmatprep.subr.mxu0 0.0
      %1171 = vmatpush1.msra.mxu0 %v1134
      %1172 = vmatprep.subr.mxu0 0.0
      %1173 = vmatpush1.msra.mxu0 %v1139
      %1174 = vmatprep.subr.mxu0 0.0
      %1175 = vmatpush1.msra.mxu0 0.0
      %1176 = vmatprep.subr.mxu0 0.0
      %1177 = vmatpush1.msra.mxu0 0.0
      %1178 = vmatprep.subr.mxu0 0.0
      %1179 = vmatpush1.msra.mxu0 0.0
      %1180 = vmatprep.subr.mxu0 0.0
      %1181 = vmatpush1.msra.mxu0 0.0
      %1182 = vmatprep.subr.mxu0 0.0
      %1183 = vmatpush1.msra.mxu0 0.0
      %1184 = vmatprep.subr.mxu0 0.0
      %1185 = vmatpush1.msra.mxu0 0.0
      %1186 = vmatprep.subr.mxu0 0.0
      %1187 = vmatpush1.msra.mxu0 0.0
      %1188 = vmatprep.subr.mxu0 0.0
      %1189 = vmatpush1.msra.mxu0 0.0
      %1190 = vmatprep.subr.mxu0 0.0
      %1191 = vmatpush1.msra.mxu0 0.0
      %1192 = vmatprep.subr.mxu0 0.0
      %1193 = vmatpush1.msra.mxu0 0.0
      %1194 = vmatprep.subr.mxu0 0.0
      %1195 = vmatpush1.msra.mxu0 0.0
      %1196 = vmatprep.subr.mxu0 0.0
      %1197 = vmatpush1.msra.mxu0 0.0
      %1198 = vmatprep.subr.mxu0 0.0
      %1199 = vmatpush1.msra.mxu0 0.0
      %1200 = vmatprep.subr.mxu0 0.0
      %1201 = vmatpush1.msra.mxu0 0.0
      %1202 = vmatprep.subr.mxu0 0.0
      %1203 = vmatpush1.msra.mxu0 0.0
      %1204 = vmatprep.subr.mxu0 0.0
      %1205 = vmatpush1.msra.mxu0 0.0
      %1206 = vmatprep.mubr.f32.mxu0 0.0
      %1207 = vmatmul.mubr.f32.gmra.mrb[0].mxu0 %v167
      %v1208 = vpop.f32.mrb[0].mxu0
      %v1209 = vadd.f32 0.0, %v1208
      %v1210 = vpop.f32.mrb[0].mxu0
      %1211 = vdwg.mxu0
      %v1213 = vrot.slane %v1209, 4
      %1214 = vrot.lane.b32.xlu0 %v1213, 124
      %v1215 = vpop.permute.xlu0 %1214
      %v1217 = vadd.f32 %v1209, %v1215
      %v1218 = vlaneseq
      %v1219 = vshrl.u32 %v1218, 7
      %v1220 = vsub.s32 0, %v1219
      %v1221 = vrot.slane %v164, %v1220
      %v1222 = vadd.f32 %v1217, %v1221
      %vm1223 = vcmp.gt.f32.partialorder %v1222, 0.0
      %v1224 = vmul.f32 %v1222, 0.01
      %v1225 = vsel %vm1223, %v1222, %v1224
      %v1226 = vlaneseq
      %v1227 = vshrl.u32 %v1226, 7
      %v1228 = vsub.s32 0, %v1227
      %v1229 = vrot.slane %v165, %v1228
      %v1230 = vmul.f32 %v1225, %v1229
      %vm1231 = vcmask 27648
      %v1232 = vsel %vm1231, %v1230, 0.0
      %1233 = vadd.xlane.f32.xlu0 %v1232
      %v1234 = vpop.xlane.xlu0 %1233
      %v1235 = vlaneseq
      %v1236 = vshrl.u32 %v1235, 7
      %v1237 = vsub.s32 0, %v1236
      %v1238 = vrot.slane %v166, %v1237
      %v1239 = vadd.f32 %v1234, %v1238
      %vm1240 = vcmask 1043456
      %v1241 = vsel %vm1240, %v1239, 0.0
      %1243 = vset.pattern.permute.xlu0 0
      %1244 = vperm.xlu0 %1243, %v1241
      %v1245 = vpop.permute.xlu0 %1244
      %1247 = vst [vmem:[%s141] sm:$0xff] %v1245
      %p1248 = scmp.lt.s32.totalorder %s13, 3
      %s1249 = scalar_select %p1248, %s13, 3
      %s1250 = smul.addr %s1249, 8
      %s1251 = scalar_lea.vmem %s2, %s1250
      // Predicated region
      $region29: #{net_forward.1} parent=27 // pred_check
        %p1252 = pneg %p78
      $region30: #{net_forward.1} parent=27 // pred_check_branch
        %1254 = sbr.rel (%p1252) target = $region32
      $region31: #{net_forward.1} parent=27 // pred_region
        _
      $region32: #{net_forward.1} parent=27 // pred_fallthru
        _
    $region28: #{net_forward.1} parent=5 // pred_fallthru
      _
    %p1255 = scmp.le.s32.totalorder 2, %s8
    // Predicated region
    $region33: #{net_forward.1} parent=5 // pred_check
      %p1256 = pneg %p1255
    $region34: #{net_forward.1} parent=5 // pred_check_branch
      %1258 = sbr.rel (%p1256) target = $region36
    $region35: #{net_forward.1} parent=5 // pred_region
      %s1259 = ssub.s32 %s8, 2
      // Predicated region
      $region37: #{net_forward.1} parent=35 // pred_check
        %p1260 = pneg %p84
      $region38: #{net_forward.1} parent=35 // pred_check_branch
        %1262 = sbr.rel (%p1260) target = $region40
      $region39: #{net_forward.1} parent=35 // pred_region
        %p1263 = scmp.lt.s32.totalorder %s14, 3
        %s1264 = scalar_select %p1263, %s14, 3
        %s1265 = smul.addr %s1264, 8
        %s1266 = scalar_lea.vmem %s2, %s1265
      $region40: #{net_forward.1} parent=35 // pred_fallthru
        _
    $region36: #{net_forward.1} parent=5 // pred_fallthru
      _
  $region6: #{net_forward.1} parent=0 // loop_footer
    %s12 = sadd.s32 1, %s8
  $region7: #{net_forward.1} parent=0 // loop_footer_branch
    %7 = sbr.rel target = $region3
  $region8: #{net_forward.1} parent=0 // loop_exit
    _

</llo_original>
